<compile_context>
chip_gen: v6e
topology: v6e:2x2x1
jax: 0.10.0
libtpu: 0.0.40
codegen_flags: <defaults>
</compile_context>

<pallas_src>
import jax
import jax.numpy as jnp
from jax.experimental import pallas as pl
from jax.experimental.pallas import tpu as pltpu


def _frozen_bn_kernel(x_ref, scale_ref, shift_ref, o_ref):
    # Hot path: y = x * scale + shift. scale/shift are (tm, 1) f32 and
    # broadcast over the lane (column) dimension. Compute in f32, cast on store.
    x = x_ref[...].astype(jnp.float32)
    y = x * scale_ref[...] + shift_ref[...]
    o_ref[...] = y.astype(o_ref.dtype)


def _choose_tiles(rows, cols, dtype):
    """Pick lane-dense tile sizes targeting ~2 MiB per x tile."""
    itemsize = jnp.dtype(dtype).itemsize
    sublane = {4: 8, 2: 16, 1: 32}.get(itemsize, 8)   # packed sublane count

    # Lane (fast) dim: full extent when modest (full-extent exemption covers
    # non-multiples of 128 and avoids ragged column tails / extra grid steps),
    # else a big multiple of 128.
    tn = cols if cols <= 4096 else 2048

    # Row dim: multiple of the packed sublane count, sized to ~2 MiB per tile
    # (measured HBM-roofline plateau), or the full extent when rows are small.
    target_bytes = 2 * 1024 * 1024
    tm = target_bytes // max(1, tn * itemsize)
    if tm >= rows:
        tm = rows                                      # full-extent exemption
    else:
        tm = max(sublane, (tm // sublane) * sublane)
    return tm, tn


def frozen_batch_norm_2d(x, weight, bias, running_mean, running_var, eps=1e-5,
                         *, tile_m=None, tile_n=None):
    """FrozenBatchNorm2d forward.

    x: (N, C, H, W); weight/bias/running_mean/running_var: (C,).
    tile_m / tile_n override the auto-chosen tile sizes (mainly for tests).
    """
    N, C, H, W = x.shape
    out_dtype = x.dtype
    rows, cols = N * C, H * W

    # Tiny per-channel parameter setup in f32 (matches PyTorch f32 buffers);
    # only O(N*C) elements of glue outside the kernel.
    scale = (weight.astype(jnp.float32)
             * jax.lax.rsqrt(running_var.astype(jnp.float32) + eps))
    shift = bias.astype(jnp.float32) - running_mean.astype(jnp.float32) * scale
    scale_rows = jnp.broadcast_to(scale[None, :], (N, C)).reshape(rows, 1)
    shift_rows = jnp.broadcast_to(shift[None, :], (N, C)).reshape(rows, 1)

    x2 = x.reshape(rows, cols)

    tm, tn = _choose_tiles(rows, cols, out_dtype)
    if tile_m is not None:
        tm = min(tile_m, rows)
    if tile_n is not None:
        tn = min(tile_n, cols)

    grid = (pl.cdiv(rows, tm), pl.cdiv(cols, tn))

    out2 = pl.pallas_call(
        _frozen_bn_kernel,
        out_shape=jax.ShapeDtypeStruct((rows, cols), out_dtype),
        grid=grid,
        in_specs=[
            pl.BlockSpec((tm, tn), lambda i, j: (i, j)),
            # Param columns: indexed by the row block only; the column grid
            # index is ignored so the same (tm, 1) slab is reused across j
            # (no re-DMA on consecutive inner-axis steps).
            pl.BlockSpec((tm, 1), lambda i, j: (i, 0)),
            pl.BlockSpec((tm, 1), lambda i, j: (i, 0)),
        ],
        out_specs=pl.BlockSpec((tm, tn), lambda i, j: (i, j)),
        compiler_params=pltpu.CompilerParams(
            dimension_semantics=("parallel", "parallel"),
            # Headroom over the v5e 16 MiB scoped default; usage with 2 MiB
            # tiles (x + out, double-buffered) is ~8-9 MiB.
            vmem_limit_bytes=32 * 1024 * 1024),
    )(x2, scale_rows, shift_rows)

    return out2.reshape(N, C, H, W)


def _reference(x, weight, bias, running_mean, running_var, eps):
    scale = (weight.astype(jnp.float32)
             * jax.lax.rsqrt(running_var.astype(jnp.float32) + eps))
    shift = bias.astype(jnp.float32) - running_mean.astype(jnp.float32) * scale
    y = (x.astype(jnp.float32) * scale.reshape(1, -1, 1, 1)
         + shift.reshape(1, -1, 1, 1))
    return y.astype(x.dtype)


if __name__ == "__main__":
    key = jax.random.PRNGKey(0)
    k_x, k_w, k_b, k_m, k_v, k_x2 = jax.random.split(key, 6)
    eps = 1e-5

    # --- Test 1: module-init buffers (identity transform), small NCHW. ---
    N, C, H, W = 2, 4, 16, 16
    x = jax.random.normal(k_x, (N, C, H, W), dtype=jnp.float32)
    weight = jnp.ones((C,), jnp.float32)
    bias = jnp.zeros((C,), jnp.float32)
    running_mean = jnp.zeros((C,), jnp.float32)
    running_var = jnp.ones((C,), jnp.float32) - eps

    out = frozen_batch_norm_2d(x, weight, bias, running_mean, running_var, eps=eps)
    out = jax.block_until_ready(out)
    ref = _reference(x, weight, bias, running_mean, running_var, eps)
    assert out.shape == (N, C, H, W) and out.dtype == x.dtype
    assert jnp.allclose(out, ref, atol=1e-6, rtol=1e-6)

    # --- Test 2: random buffers + forced small tiles (exercises the 2-D grid
    # with ragged row/col edges and param-column reuse across j). ---
    N2, C2, H2, W2 = 2, 5, 12, 20                      # rows=10, cols=240
    x2 = jax.random.normal(k_x2, (N2, C2, H2, W2), dtype=jnp.float32)
    w2 = jax.random.normal(k_w, (C2,), dtype=jnp.float32)
    b2 = jax.random.normal(k_b, (C2,), dtype=jnp.float32)
    m2 = jax.random.normal(k_m, (C2,), dtype=jnp.float32)
    v2 = jax.random.uniform(k_v, (C2,), dtype=jnp.float32,
                            minval=0.5, maxval=1.5)
    out2 = frozen_batch_norm_2d(x2, w2, b2, m2, v2, eps=eps,
                                tile_m=8, tile_n=128)
    out2 = jax.block_until_ready(out2)
    ref2 = _reference(x2, w2, b2, m2, v2, eps)
    assert jnp.allclose(out2, ref2, atol=1e-5, rtol=1e-5)

    # --- Test 3: bf16 activations (f32 FMA in-kernel, cast on store). ---
    xb = x2.astype(jnp.bfloat16)
    outb = frozen_batch_norm_2d(xb, w2, b2, m2, v2, eps=eps)
    outb = jax.block_until_ready(outb)
    refb = _reference(xb, w2, b2, m2, v2, eps)
    assert outb.dtype == jnp.bfloat16
    assert jnp.allclose(outb.astype(jnp.float32), refb.astype(jnp.float32),
                        atol=1e-2, rtol=1e-2)

    print("KERNEL_OK")
</pallas_src>

<mosaic_0001>
module attributes {stable_mosaic.version = 11 : i64} {
  func.func @_frozen_bn_kernel(%arg0: i32, %arg1: i32, %arg2: memref<8x256xf32, #tpu.memory_space<vmem>>, %arg3: memref<8x1xf32, #tpu.memory_space<vmem>>, %arg4: memref<8x1xf32, #tpu.memory_space<vmem>>, %arg5: memref<8x256xf32, #tpu.memory_space<vmem>>) attributes {dimension_semantics = [#tpu.dimension_semantics<parallel>, #tpu.dimension_semantics<parallel>], iteration_bounds = array<i64: 1, 1>, scalar_prefetch = 0 : i64, scratch_operands = 0 : i64, tpu.core_type = #tpu.core_type<tc>, window_params = [{transform_indices = @transform_0, window_bounds = array<i64: 8, 256>}, {transform_indices = @transform_1, window_bounds = array<i64: 8, 1>}, {transform_indices = @transform_2, window_bounds = array<i64: 8, 1>}, {transform_indices = @transform_3, window_bounds = array<i64: 8, 256>}]} {
    %c0 = arith.constant 0 : index
    %c0_0 = arith.constant 0 : index
    %0 = vector.load %arg2[%c0, %c0_0] : memref<8x256xf32, #tpu.memory_space<vmem>>, vector<8x256xf32>
    %c0_1 = arith.constant 0 : index
    %c0_2 = arith.constant 0 : index
    %1 = vector.load %arg3[%c0_1, %c0_2] : memref<8x1xf32, #tpu.memory_space<vmem>>, vector<8x1xf32>
    %2 = vector.broadcast %1 : vector<8x1xf32> to vector<8x256xf32>
    %3 = arith.mulf %0, %2 : vector<8x256xf32>
    %c0_3 = arith.constant 0 : index
    %c0_4 = arith.constant 0 : index
    %4 = vector.load %arg4[%c0_3, %c0_4] : memref<8x1xf32, #tpu.memory_space<vmem>>, vector<8x1xf32>
    %5 = vector.broadcast %4 : vector<8x1xf32> to vector<8x256xf32>
    %6 = arith.addf %3, %5 : vector<8x256xf32>
    %c0_5 = arith.constant 0 : index
    %c0_6 = arith.constant 0 : index
    %7 = vector.load %arg5[%c0_5, %c0_6] : memref<8x256xf32, #tpu.memory_space<vmem>>, vector<8x256xf32>
    tpu.vector_store %arg5[%c0_5, %c0_6], %6 {strides = array<i32>} : memref<8x256xf32, #tpu.memory_space<vmem>>, vector<8x256xf32>,
    return
  }
  func.func @transform_0(%arg0: i32, %arg1: i32) -> (i32, i32) {
    %c0_i32 = arith.constant 0 : i32
    return %arg0, %arg1 : i32, i32
  }
  func.func @transform_1(%arg0: i32, %arg1: i32) -> (i32, i32) {
    %c0_i32 = arith.constant 0 : i32
    %c0_i32_0 = arith.constant 0 : i32
    return %arg0, %c0_i32 : i32, i32
  }
  func.func @transform_2(%arg0: i32, %arg1: i32) -> (i32, i32) {
    %c0_i32 = arith.constant 0 : i32
    %c0_i32_0 = arith.constant 0 : i32
    return %arg0, %c0_i32 : i32, i32
  }
  func.func @transform_3(%arg0: i32, %arg1: i32) -> (i32, i32) {
    %c0_i32 = arith.constant 0 : i32
    return %arg0, %arg1 : i32, i32
  }
}

</mosaic_0001>

<llo_original>
// kernel: tpu_custom_call.1
$region0: #{tpu_custom_call.1}
  #allocation0 [shape = 'u32[]', space=smem, size = 0x4, offset = 0x4, fixed_abs, tag = 'smem constant byte address 0x4 - core index']
  #allocation1 [shape = 'u32[144,128]{1,0:T(1,128)}', space=vmem, size = 0x12000, scoped, tag = 'internal scratch']
  %s0 = inlined_call_operand.vmem [shape: f32[8,256], index: 0, kind: input, shape index: {}]
  %s1 = inlined_call_operand.vmem [shape: f32[8,1], index: 1, kind: input, shape index: {}]
  %s2 = inlined_call_operand.vmem [shape: f32[8,1], index: 2, kind: input, shape index: {}]
  %s3 = inlined_call_operand.hbm [shape: f32[8,256], index: 3, kind: output, shape index: {}]
  %s4 = sld [smem:[#allocation0]]
  $region22: #{tpu_custom_call.1} parent=0
    _
  %s6 = ssub.s32 1, %s4
  %s7 = scalar_select 0, %s6, %s4
  $region1: #{tpu_custom_call.1} parent=0
    #allocation2 [shape = 'u8[8192]{0}', space=vmem, size = 0x2000, scoped, tag = 'output window, operand 0, single buffered']
    #allocation3 [shape = 's32[1]{0}', space=sflag, size = 0x4, scoped, tag = 'scoped memory for tpu_custom_call.1']
    %8 = vsyncpa [#allocation3], 0
    // Predicated region
    $region2: #{tpu_custom_call.1} parent=1 // pred_check
      _
    $region3: #{tpu_custom_call.1} parent=1 // pred_check_branch
      %10 = sbr.rel (0) target = $region5
    $region4: #{tpu_custom_call.1} parent=1 // pred_region
      _
    $region5: #{tpu_custom_call.1} parent=1 // pred_fallthru
      _
    // Predicated region
    $region6: #{tpu_custom_call.1} parent=1 // pred_check
      _
    $region7: #{tpu_custom_call.1} parent=1 // pred_check_branch
      %12 = sbr.rel (0) target = $region9
    $region8: #{tpu_custom_call.1} parent=1 // pred_region
      _
    $region9: #{tpu_custom_call.1} parent=1 // pred_fallthru
      _
    // Predicated region
    $region10: #{tpu_custom_call.1} parent=1 // pred_check
      _
    $region11: #{tpu_custom_call.1} parent=1 // pred_check_branch
      %14 = sbr.rel (0) target = $region13
    $region12: #{tpu_custom_call.1} parent=1 // pred_region
      _
    $region13: #{tpu_custom_call.1} parent=1 // pred_fallthru
      _
    %v15 = vld [vmem:[%s0] sm:$0xff]
    %v16 = vld [vmem:[%s0 + $0x8] sm:$0xff]
    %v17 = vld [vmem:[%s1] sm:$0xff]
    %19 = vset.pattern.permute.xlu0 0
    %20 = vperm.xlu0 %19, %v17
    %v21 = vpop.permute.xlu0 %20
    %v23 = vmul.f32 %v15, %v21
    %v24 = vmul.f32 %v16, %v21
    %v25 = vld [vmem:[%s2] sm:$0xff]
    %27 = vset.pattern.permute.xlu0 0
    %28 = vperm.xlu0 %27, %v25
    %v29 = vpop.permute.xlu0 %28
    %v31 = vadd.f32 %v23, %v29
    %v32 = vadd.f32 %v24, %v29
    %33 = vst [vmem:[#allocation2] sm:$0xff] %v31
    %34 = vst [vmem:[#allocation2 + $0x8] sm:$0xff] %v32
    // Predicated region
    $region14: #{tpu_custom_call.1} parent=1 // pred_check
      _
    $region15: #{tpu_custom_call.1} parent=1 // pred_check_branch
      %36 = sbr.rel (0) target = $region17
    $region16: #{tpu_custom_call.1} parent=1 // pred_region
      %s38 = ssub.s32 256, 256
      %39 = vsyncadd [#allocation3], %s38
      %s41 = sshll.u32 [#allocation2], 4
      %s42 = int_to_ptr.vmem [resolvable:$true] %s41
      %44 = dma.vmem_to_hbm [thread:$0]  %s42, 256, %s3, [#allocation3]
    $region17: #{tpu_custom_call.1} parent=1 // pred_fallthru
      _
    // Predicated region
    $region18: #{tpu_custom_call.1} parent=1 // pred_check
      _
    $region19: #{tpu_custom_call.1} parent=1 // pred_check_branch
      %46 = sbr.rel (0) target = $region21
    $region20: #{tpu_custom_call.1} parent=1 // pred_region
      %47 = dma.done [#allocation3], 256
    $region21: #{tpu_custom_call.1} parent=1 // pred_fallthru
      _
    %48 = vsyncpa [#allocation3], 1

</llo_original>
